<compile_context>
chip_gen: v7x
topology: tpu7x:2x2x1
jax: 0.10.0
libtpu: 0.0.40
codegen_flags: <defaults>
</compile_context>

<pallas_src>
import math

import jax
import jax.numpy as jnp
from jax.experimental import pallas as pl
from jax.experimental.pallas import tpu as pltpu


def attn_kernel(hproj_ref, enc_ref, we_ref, v_ref, out_ref):
    """One batch-chunk per grid step, native time-major layout.

    hproj_ref: (TB, H) f32   precomputed hidden @ Wh + bias (hoisted to wrapper)
    enc_ref:   (T, TB, H)    encoder outputs in native (T, B, H) layout (input dtype)
    we_ref:    (H, H)        encoder half of the attention Linear weight (input dtype)
    v_ref:     (1, H)  f32   scoring vector
    out_ref:   (TB, H)       context vectors (input dtype)
    """
    T, TB, H = enc_ref.shape
    enc = enc_ref[...]                                      # (T, TB, H)

    # Row-batched MXU projection with f32 accumulation.  TB % 8 == 0 (wrapper
    # guarantees it), so merging (T, TB) -> T*TB rows is layout-free (no VMEM
    # retile copy).
    pre = jnp.dot(enc.reshape(T * TB, H), we_ref[...],
                  preferred_element_type=jnp.float32).reshape(T, TB, H)
    energy = jnp.tanh(pre + hproj_ref[...][None, :, :])     # (T, TB, H) f32

    # Scores on the VPU/XLU (lane reduce over H, keepdims keeps the natural
    # sublane=batch layout); the MXU stays free for the big projection.
    v = v_ref[...].astype(jnp.float32)                      # (1, H)
    scores = jnp.sum(energy * v[None, :, :], axis=-1, keepdims=True)  # (T, TB, 1)

    # Softmax over the sequence (leading) axis: pure elementwise reductions
    # across T tiles, no cross-lane relayout anywhere.
    m = jnp.max(scores, axis=0, keepdims=True)              # (1, TB, 1)
    ex = jnp.exp(scores - m)                                 # (T, TB, 1)
    denom = jnp.sum(ex, axis=0, keepdims=True)               # (1, TB, 1)
    # Single reciprocal on the reduced denominator, then broadcast multiply.
    # (pl.reciprocal(..., approx=True) would push it to the EUP slot at
    # ~bf16-level precision; exact keeps 1e-4 parity with the reference.)
    alpha = ex * pl.reciprocal(denom)                        # (T, TB, 1)

    # Context: weighted sum over T on the VPU -> dense (TB, H) store.
    ctx = jnp.sum(alpha * enc.astype(jnp.float32), axis=0)   # (TB, H)
    out_ref[...] = ctx.astype(out_ref.dtype)


def _pick_tb(B, T, H, enc_itemsize):
    """Batch-chunk size: multiple of 8 (sublane tile), grown until the
    projection matmul has ~2048 rows while keeping the per-step working set
    (double-buffered enc block + f32 intermediates) under ~28 MiB (safe for
    v7x's 64 MiB VMEM) and keeping >= 2 grid steps when B allows (2 TCs)."""
    budget = 28 << 20

    def work_bytes(tb):
        # 2x buffered enc block + ~2 f32 (T,TB,H) intermediates + hproj/out.
        return tb * T * H * (2 * enc_itemsize + 2 * 4) + 6 * tb * H * 4

    if B <= 8:
        return 8                          # wrapper pads the batch up to 8
    tb = 8
    while (2 * (tb * 2) <= B              # keep at least 2 grid steps
           and tb * T < 2048              # until the MXU M-dim is well filled
           and work_bytes(tb * 2) <= budget):
        tb *= 2
    return tb


@jax.jit
def attn_forward(hidden, encoder_outputs, W, b, v):
    """hidden: (1,B,H), encoder_outputs: (T,B,H), W: (H,2H), b: (H,), v: (H,).
    Returns the attention context as (1, B, H), matching the PyTorch module."""
    _, B, H = hidden.shape
    T = encoder_outputs.shape[0]
    enc_dtype = encoder_outputs.dtype
    itemsize = jnp.dtype(enc_dtype).itemsize

    Wt = W.T                              # (2H, H)
    Wh = Wt[:H]                           # hidden part of the Linear
    We = Wt[H:].astype(enc_dtype)         # encoder part (matmul inputs in enc dtype)

    # Hoisted: one full-batch XLA matmul with the bias folded in (f32).
    hproj = (hidden[0].astype(jnp.float32) @ Wh.astype(jnp.float32)
             + b.astype(jnp.float32))     # (B, H)
    v2 = v.reshape(1, H).astype(jnp.float32)

    TB = _pick_tb(B, T, H, itemsize)

    # Tiny batches: pad up to one full sublane tile so every block is
    # (8k, H)-aligned.  Padded rows are independent zeros (finite garbage) and
    # are sliced off below.  For B >= 8 the tail block is handled by Pallas's
    # own block padding; rows are independent, so valid outputs are exact.
    Bp = max(B, TB)
    if Bp > B:
        pad = Bp - B
        encoder_outputs = jnp.pad(encoder_outputs, ((0, 0), (0, pad), (0, 0)))
        hproj = jnp.pad(hproj, ((0, pad), (0, 0)))

    grid = (pl.cdiv(Bp, TB),)

    block_bytes = (T * TB * H * itemsize          # enc block
                   + 2 * T * TB * H * 4           # f32 intermediates (pre/energy)
                   + 4 * TB * H * 4               # hproj + out blocks (+ headroom)
                   + H * H * itemsize + H * 4)    # resident We + v
    vmem_limit = int(min(max(2 * block_bytes, 8 << 20), 64 << 20))

    out = pl.pallas_call(
        attn_kernel,
        out_shape=jax.ShapeDtypeStruct((Bp, H), enc_dtype),
        grid=grid,
        in_specs=[
            pl.BlockSpec((TB, H), lambda i: (i, 0)),         # hproj (dense 2-D)
            pl.BlockSpec((T, TB, H), lambda i: (0, i, 0)),   # enc, native layout
            pl.BlockSpec((H, H), lambda i: (0, 0)),          # We (resident weight)
            pl.BlockSpec((1, H), lambda i: (0, 0)),          # v  (resident)
        ],
        out_specs=pl.BlockSpec((TB, H), lambda i: (i, 0)),
        compiler_params=pltpu.CompilerParams(
            dimension_semantics=("parallel",),
            vmem_limit_bytes=vmem_limit,
        ),
        cost_estimate=pl.CostEstimate(
            flops=2 * Bp * T * H * H + 6 * Bp * T * H,
            transcendentals=Bp * T * (H + 1),
            bytes_accessed=(Bp * T * H * itemsize + Bp * H * (4 + itemsize)
                            + H * H * itemsize + H * 4),
        ),
    )(hproj, encoder_outputs, We, v2)

    # (Bp, H) -> (1, B, H): slice + metadata-only reshape (no transpose).
    return out[:B].reshape(1, B, H).astype(hidden.dtype)


def attn_reference(hidden, encoder_outputs, W, b, v):
    """Pure-JAX reference mirroring the PyTorch forward exactly."""
    enc = jnp.transpose(encoder_outputs, (1, 0, 2))        # (B, T, H)
    B, T, H = enc.shape
    Hexp = jnp.broadcast_to(hidden[0][:, None, :], (B, T, H))
    cat = jnp.concatenate([Hexp, enc], axis=2)             # (B, T, 2H)
    energy = jnp.tanh(cat @ W.T + b)                       # (B, T, H)
    scores = jnp.einsum('h,bth->bt', v, energy)            # (B, T)
    alpha = jax.nn.softmax(scores, axis=1)
    ctx = jnp.einsum('bt,bth->bh', alpha, enc)             # (B, H)
    return ctx[None]                                       # (1, B, H)


if __name__ == "__main__":
    B, T, H = 2, 8, 32

    key = jax.random.PRNGKey(0)
    k_h, k_e, k_w, k_b, k_v = jax.random.split(key, 5)

    hidden = jax.random.normal(k_h, (1, B, H), dtype=jnp.float32)
    encoder_outputs = jax.random.normal(k_e, (T, B, H), dtype=jnp.float32)

    # nn.Linear(2H, H): weight (H, 2H), bias (H,), uniform(-1/sqrt(2H), 1/sqrt(2H))
    stdv_lin = 1.0 / math.sqrt(2 * H)
    W = jax.random.uniform(k_w, (H, 2 * H), minval=-stdv_lin, maxval=stdv_lin,
                           dtype=jnp.float32)
    bias = jax.random.uniform(k_b, (H,), minval=-stdv_lin, maxval=stdv_lin,
                              dtype=jnp.float32)
    # v ~ Normal(0, 1/sqrt(H))
    v = (1.0 / math.sqrt(H)) * jax.random.normal(k_v, (H,), dtype=jnp.float32)

    out = jax.block_until_ready(attn_forward(hidden, encoder_outputs, W, bias, v))
    ref = attn_reference(hidden, encoder_outputs, W, bias, v)

    assert out.shape == (1, B, H), out.shape
    max_err = float(jnp.max(jnp.abs(out - ref)))
    # f32 accumulation everywhere; small margin for MXU vs XLA contraction order.
    assert max_err < 1e-4, max_err

    print("KERNEL_OK")
</pallas_src>

<mosaic_0001>
module attributes {stable_mosaic.version = 11 : i64} {
  func.func @attn_kernel(%arg0: i32, %arg1: memref<8x32xf32, #tpu.memory_space<vmem>>, %arg2: memref<8x8x32xf32, #tpu.memory_space<vmem>>, %arg3: memref<32x32xf32, #tpu.memory_space<vmem>>, %arg4: memref<1x32xf32, #tpu.memory_space<vmem>>, %arg5: memref<8x32xf32, #tpu.memory_space<vmem>>) attributes {dimension_semantics = [#tpu.dimension_semantics<parallel>], iteration_bounds = array<i64: 1>, scalar_prefetch = 0 : i64, scratch_operands = 0 : i64, tpu.core_type = #tpu.core_type<tc>, window_params = [{transform_indices = @transform_0, window_bounds = array<i64: 8, 32>}, {transform_indices = @transform_1, window_bounds = array<i64: 8, 8, 32>}, {pipeline_mode = #tpu.pipeline_mode<synchronous>, transform_indices = @transform_2, window_bounds = array<i64: 32, 32>}, {pipeline_mode = #tpu.pipeline_mode<synchronous>, transform_indices = @transform_3, window_bounds = array<i64: 1, 32>}, {transform_indices = @transform_4, window_bounds = array<i64: 8, 32>}]} {
    %c0 = arith.constant 0 : index
    %c0_0 = arith.constant 0 : index
    %c0_1 = arith.constant 0 : index
    %0 = vector.load %arg2[%c0, %c0_0, %c0_1] : memref<8x8x32xf32, #tpu.memory_space<vmem>>, vector<8x8x32xf32>
    %1 = vector.shape_cast %0 : vector<8x8x32xf32> to vector<64x32xf32>
    %c0_2 = arith.constant 0 : index
    %c0_3 = arith.constant 0 : index
    %2 = vector.load %arg3[%c0_2, %c0_3] : memref<32x32xf32, #tpu.memory_space<vmem>>, vector<32x32xf32>
    %cst = arith.constant dense<0.000000e+00> : vector<64x32xf32>
    %3 = tpu.matmul %1, %2, %cst {dimension_numbers = #tpu.dot_dimension_numbers<[1], [0], [0], [1], [0, 0, 1, 1], [], []>} : vector<64x32xf32>, vector<32x32xf32>, vector<64x32xf32> -> vector<64x32xf32>
    %4 = vector.shape_cast %3 : vector<64x32xf32> to vector<8x8x32xf32>
    %c0_4 = arith.constant 0 : index
    %c0_5 = arith.constant 0 : index
    %5 = vector.load %arg1[%c0_4, %c0_5] : memref<8x32xf32, #tpu.memory_space<vmem>>, vector<8x32xf32>
    %6 = vector.shape_cast %5 : vector<8x32xf32> to vector<1x8x32xf32>
    %7 = vector.broadcast %6 : vector<1x8x32xf32> to vector<8x8x32xf32>
    %8 = arith.addf %4, %7 : vector<8x8x32xf32>
    %9 = math.tanh %8 : vector<8x8x32xf32>
    %c0_6 = arith.constant 0 : index
    %c0_7 = arith.constant 0 : index
    %10 = vector.load %arg4[%c0_6, %c0_7] : memref<1x32xf32, #tpu.memory_space<vmem>>, vector<1x32xf32>
    %11 = vector.shape_cast %10 : vector<1x32xf32> to vector<1x1x32xf32>
    %12 = vector.broadcast %11 : vector<1x1x32xf32> to vector<8x8x32xf32>
    %13 = arith.mulf %9, %12 : vector<8x8x32xf32>
    %cst_8 = arith.constant dense<0.000000e+00> : vector<8x8xf32>
    %14 = vector.multi_reduction <add>, %13, %cst_8 [2] : vector<8x8x32xf32> to vector<8x8xf32>
    %15 = vector.shape_cast %14 : vector<8x8xf32> to vector<8x8x1xf32>
    %cst_9 = arith.constant dense<0xFF800000> : vector<8x1xf32>
    %16 = vector.multi_reduction <maximumf>, %15, %cst_9 [0] : vector<8x8x1xf32> to vector<8x1xf32>
    %17 = vector.shape_cast %16 : vector<8x1xf32> to vector<1x8x1xf32>
    %18 = vector.broadcast %17 : vector<1x8x1xf32> to vector<8x8x1xf32>
    %19 = arith.subf %15, %18 : vector<8x8x1xf32>
    %20 = math.exp %19 : vector<8x8x1xf32>
    %cst_10 = arith.constant dense<0.000000e+00> : vector<8x1xf32>
    %21 = vector.multi_reduction <add>, %20, %cst_10 [0] : vector<8x8x1xf32> to vector<8x1xf32>
    %22 = vector.shape_cast %21 : vector<8x1xf32> to vector<1x8x1xf32>
    %23 = tpu.reciprocal %22 : vector<1x8x1xf32> -> vector<1x8x1xf32>
    %24 = vector.broadcast %23 : vector<1x8x1xf32> to vector<8x8x1xf32>
    %25 = arith.mulf %20, %24 : vector<8x8x1xf32>
    %26 = vector.broadcast %25 : vector<8x8x1xf32> to vector<8x8x32xf32>
    %27 = arith.mulf %26, %0 : vector<8x8x32xf32>
    %cst_11 = arith.constant dense<0.000000e+00> : vector<8x32xf32>
    %28 = vector.multi_reduction <add>, %27, %cst_11 [0] : vector<8x8x32xf32> to vector<8x32xf32>
    %c0_12 = arith.constant 0 : index
    %c0_13 = arith.constant 0 : index
    %29 = vector.load %arg5[%c0_12, %c0_13] : memref<8x32xf32, #tpu.memory_space<vmem>>, vector<8x32xf32>
    tpu.vector_store %arg5[%c0_12, %c0_13], %28 {strides = array<i32>} : memref<8x32xf32, #tpu.memory_space<vmem>>, vector<8x32xf32>,
    return
  }
  func.func @transform_0(%arg0: i32) -> (i32, i32) {
    %c0_i32 = arith.constant 0 : i32
    %c0_i32_0 = arith.constant 0 : i32
    return %arg0, %c0_i32 : i32, i32
  }
  func.func @transform_1(%arg0: i32) -> (i32, i32, i32) {
    %c0_i32 = arith.constant 0 : i32
    %c0_i32_0 = arith.constant 0 : i32
    %c0_i32_1 = arith.constant 0 : i32
    return %c0_i32, %arg0, %c0_i32_0 : i32, i32, i32
  }
  func.func @transform_2(%arg0: i32) -> (i32, i32) {
    %c0_i32 = arith.constant 0 : i32
    %c0_i32_0 = arith.constant 0 : i32
    %c0_i32_1 = arith.constant 0 : i32
    return %c0_i32, %c0_i32_0 : i32, i32
  }
  func.func @transform_3(%arg0: i32) -> (i32, i32) {
    %c0_i32 = arith.constant 0 : i32
    %c0_i32_0 = arith.constant 0 : i32
    %c0_i32_1 = arith.constant 0 : i32
    return %c0_i32, %c0_i32_0 : i32, i32
  }
  func.func @transform_4(%arg0: i32) -> (i32, i32) {
    %c0_i32 = arith.constant 0 : i32
    %c0_i32_0 = arith.constant 0 : i32
    return %arg0, %c0_i32 : i32, i32
  }
}

</mosaic_0001>

<llo_original>
// kernel: attn_forward.1
$region0: #{attn_forward.1}
  #allocation0 [shape = 'u32[]', space=smem, size = 0x4, offset = 0x4, fixed_abs, tag = 'smem constant byte address 0x4 - core index']
  #allocation1 [shape = 'u32[144,128]{1,0:T(1,128)}', space=vmem, size = 0x12000, scoped, tag = 'internal scratch']
  %s0 = inlined_call_operand.vmem [shape: f32[8,32], index: 0, kind: input, shape index: {}]
  %s1 = inlined_call_operand.vmem [shape: f32[8,8,32], index: 1, kind: input, shape index: {}]
  %s2 = inlined_call_operand.vmem [shape: f32[32,32], index: 2, kind: input, shape index: {}]
  %s3 = inlined_call_operand.vmem [shape: f32[1,32], index: 3, kind: input, shape index: {}]
  %s4 = inlined_call_operand.vmem [shape: f32[8,32], index: 4, kind: output, shape index: {}]
  %s5 = sld [smem:[#allocation0]]
  $region26: #{attn_forward.1} parent=0
    _
  %s7 = ssub.s32 1, %s5
  %s8 = scalar_select 0, %s7, %s5
  // Predicated region
  $region2: #{attn_forward.1} parent=0 // pred_check
    _
  $region3: #{attn_forward.1} parent=0 // pred_check_branch
    %10 = sbr.rel (0) target = $region5
  $region4: #{attn_forward.1} parent=0 // pred_region
    _
  $region5: #{attn_forward.1} parent=0 // pred_fallthru
    _
  // Predicated region
  $region6: #{attn_forward.1} parent=0 // pred_check
    _
  $region7: #{attn_forward.1} parent=0 // pred_check_branch
    %12 = sbr.rel (0) target = $region9
  $region8: #{attn_forward.1} parent=0 // pred_region
    _
  $region9: #{attn_forward.1} parent=0 // pred_fallthru
    _
  // Predicated region
  $region10: #{attn_forward.1} parent=0 // pred_check
    _
  $region11: #{attn_forward.1} parent=0 // pred_check_branch
    %14 = sbr.rel (0) target = $region13
  $region12: #{attn_forward.1} parent=0 // pred_region
    _
  $region13: #{attn_forward.1} parent=0 // pred_fallthru
    _
  // Predicated region
  $region14: #{attn_forward.1} parent=0 // pred_check
    _
  $region15: #{attn_forward.1} parent=0 // pred_check_branch
    %16 = sbr.rel (0) target = $region17
  $region16: #{attn_forward.1} parent=0 // pred_region
    _
  $region17: #{attn_forward.1} parent=0 // pred_fallthru
    _
  %v17 = vld [vmem:[%s1] sm:$0xff]
  %v18 = vld [vmem:[%s1 + $0x8] sm:$0xff]
  %v19 = vld [vmem:[%s1 + $0x10] sm:$0xff]
  %v20 = vld [vmem:[%s1 + $0x18] sm:$0xff]
  %v21 = vld [vmem:[%s1 + $0x20] sm:$0xff]
  %v22 = vld [vmem:[%s1 + $0x28] sm:$0xff]
  %v23 = vld [vmem:[%s1 + $0x30] sm:$0xff]
  %v24 = vld [vmem:[%s1 + $0x38] sm:$0xff]
  %v25 = vld [vmem:[%s2] sm:$0xff]
  %v26 = vld [vmem:[%s2 + $0x8] sm:$0xff]
  %v27 = vld [vmem:[%s2 + $0x10] sm:$0xff]
  %v28 = vld [vmem:[%s2 + $0x18] sm:$0xff]
  %vm29 = vcmask 261120
  %v31 = vsel %vm29, %v17, 0
  %v34 = vsel %vm29, %v18, 0
  %v37 = vsel %vm29, %v19, 0
  %v40 = vsel %vm29, %v20, 0
  %v43 = vsel %vm29, %v21, 0
  %v46 = vsel %vm29, %v22, 0
  %v49 = vsel %vm29, %v23, 0
  %v52 = vsel %vm29, %v24, 0
  %54 = vmatprep.subr.mxu0 0.0
  %55 = vmatpush1.msra.mxu0 %v25
  %56 = vmatprep.subr.mxu0 0.0
  %57 = vmatpush1.msra.mxu0 %v26
  %58 = vmatprep.subr.mxu0 0.0
  %59 = vmatpush1.msra.mxu0 %v27
  %60 = vmatprep.subr.mxu0 0.0
  %61 = vmatpush1.msra.mxu0 %v28
  %62 = vmatprep.subr.mxu0 0.0
  %63 = vmatpush1.msra.mxu0 0.0
  %64 = vmatprep.subr.mxu0 0.0
  %65 = vmatpush1.msra.mxu0 0.0
  %66 = vmatprep.subr.mxu0 0.0
  %67 = vmatpush1.msra.mxu0 0.0
  %68 = vmatprep.subr.mxu0 0.0
  %69 = vmatpush1.msra.mxu0 0.0
  %70 = vmatprep.subr.mxu0 0.0
  %71 = vmatpush1.msra.mxu0 0.0
  %72 = vmatprep.subr.mxu0 0.0
  %73 = vmatpush1.msra.mxu0 0.0
  %74 = vmatprep.subr.mxu0 0.0
  %75 = vmatpush1.msra.mxu0 0.0
  %76 = vmatprep.subr.mxu0 0.0
  %77 = vmatpush1.msra.mxu0 0.0
  %78 = vmatprep.subr.mxu0 0.0
  %79 = vmatpush1.msra.mxu0 0.0
  %80 = vmatprep.subr.mxu0 0.0
  %81 = vmatpush1.msra.mxu0 0.0
  %82 = vmatprep.subr.mxu0 0.0
  %83 = vmatpush1.msra.mxu0 0.0
  %84 = vmatprep.subr.mxu0 0.0
  %85 = vmatpush1.msra.mxu0 0.0
  %86 = vmatprep.subr.mxu0 0.0
  %87 = vmatpush1.msra.mxu0 0.0
  %88 = vmatprep.subr.mxu0 0.0
  %89 = vmatpush1.msra.mxu0 0.0
  %90 = vmatprep.subr.mxu0 0.0
  %91 = vmatpush1.msra.mxu0 0.0
  %92 = vmatprep.subr.mxu0 0.0
  %93 = vmatpush1.msra.mxu0 0.0
  %94 = vmatprep.subr.mxu0 0.0
  %95 = vmatpush1.msra.mxu0 0.0
  %96 = vmatprep.subr.mxu0 0.0
  %97 = vmatpush1.msra.mxu0 0.0
  %98 = vmatprep.subr.mxu0 0.0
  %99 = vmatpush1.msra.mxu0 0.0
  %100 = vmatprep.subr.mxu0 0.0
  %101 = vmatpush1.msra.mxu0 0.0
  %102 = vmatprep.subr.mxu0 0.0
  %103 = vmatpush1.msra.mxu0 0.0
  %104 = vmatprep.subr.mxu0 0.0
  %105 = vmatpush1.msra.mxu0 0.0
  %106 = vmatprep.subr.mxu0 0.0
  %107 = vmatpush1.msra.mxu0 0.0
  %108 = vmatprep.subr.mxu0 0.0
  %109 = vmatpush1.msra.mxu0 0.0
  %110 = vmatprep.subr.mxu0 0.0
  %111 = vmatpush1.msra.mxu0 0.0
  %112 = vmatprep.subr.mxu0 0.0
  %113 = vmatpush1.msra.mxu0 0.0
  %114 = vmatprep.subr.mxu0 0.0
  %115 = vmatpush1.msra.mxu0 0.0
  %116 = vmatprep.subr.mxu0 0.0
  %117 = vmatpush1.msra.mxu0 0.0
  %118 = vmatprep.mubr.f32.mxu0 0.0
  %119 = vmatmul.mubr.f32.gmra.mrb[0].mxu0 %v31
  %v120 = vpop.f32.mrb[0].mxu0
  %v121 = vadd.f32 0.0, %v120
  %v122 = vpop.f32.mrb[0].mxu0
  %123 = vmatprep.mubr.f32.mxu0 0.0
  %124 = vmatmul.mubr.f32.gmra.mrb[0].mxu0 %v34
  %v125 = vpop.f32.mrb[0].mxu0
  %v126 = vadd.f32 0.0, %v125
  %v127 = vpop.f32.mrb[0].mxu0
  %128 = vmatprep.mubr.f32.mxu0 0.0
  %129 = vmatmul.mubr.f32.gmra.mrb[0].mxu0 %v37
  %v130 = vpop.f32.mrb[0].mxu0
  %v131 = vadd.f32 0.0, %v130
  %v132 = vpop.f32.mrb[0].mxu0
  %133 = vmatprep.mubr.f32.mxu0 0.0
  %134 = vmatmul.mubr.f32.gmra.mrb[0].mxu0 %v40
  %v135 = vpop.f32.mrb[0].mxu0
  %v136 = vadd.f32 0.0, %v135
  %v137 = vpop.f32.mrb[0].mxu0
  %138 = vmatprep.mubr.f32.mxu0 0.0
  %139 = vmatmul.mubr.f32.gmra.mrb[0].mxu0 %v43
  %v140 = vpop.f32.mrb[0].mxu0
  %v141 = vadd.f32 0.0, %v140
  %v142 = vpop.f32.mrb[0].mxu0
  %143 = vmatprep.mubr.f32.mxu0 0.0
  %144 = vmatmul.mubr.f32.gmra.mrb[0].mxu0 %v46
  %v145 = vpop.f32.mrb[0].mxu0
  %v146 = vadd.f32 0.0, %v145
  %v147 = vpop.f32.mrb[0].mxu0
  %148 = vmatprep.mubr.f32.mxu0 0.0
  %149 = vmatmul.mubr.f32.gmra.mrb[0].mxu0 %v49
  %v150 = vpop.f32.mrb[0].mxu0
  %v151 = vadd.f32 0.0, %v150
  %v152 = vpop.f32.mrb[0].mxu0
  %153 = vmatprep.mubr.f32.mxu0 0.0
  %154 = vmatmul.mubr.f32.gmra.mrb[0].mxu0 %v52
  %v155 = vpop.f32.mrb[0].mxu0
  %v156 = vadd.f32 0.0, %v155
  %v157 = vpop.f32.mrb[0].mxu0
  %158 = vdwg.mxu0
  %v159 = vld [vmem:[%s0] sm:$0xff]
  %v160 = vadd.f32 %v121, %v159
  %v161 = vadd.f32 %v126, %v159
  %v162 = vadd.f32 %v131, %v159
  %v163 = vadd.f32 %v136, %v159
  %v164 = vadd.f32 %v141, %v159
  %v165 = vadd.f32 %v146, %v159
  %v166 = vadd.f32 %v151, %v159
  %v167 = vadd.f32 %v156, %v159
  %v168 = vtanh.pop %v160
  %v169 = vtanh.pop %v161
  %v170 = vtanh.pop %v162
  %v171 = vtanh.pop %v163
  %v172 = vtanh.pop %v164
  %v173 = vtanh.pop %v165
  %v174 = vtanh.pop %v166
  %v175 = vtanh.pop %v167
  %v176 = vld [vmem:[%s3] sm:$0x1]
  %v178 = vlaneseq
  %v179 = vshrl.u32 %v178, 7
  %v180 = vsub.s32 0, %v179
  %v181 = vrot.slane %v176, %v180
  %v183 = vmul.f32 %v168, %v181
  %v184 = vmul.f32 %v169, %v181
  %v185 = vmul.f32 %v170, %v181
  %v186 = vmul.f32 %v171, %v181
  %v187 = vmul.f32 %v172, %v181
  %v188 = vmul.f32 %v173, %v181
  %v189 = vmul.f32 %v174, %v181
  %v190 = vmul.f32 %v175, %v181
  %v191 = vsel %vm29, %v183, 0.0
  %192 = vadd.xlane.f32.xlu0 %v191
  %v193 = vpop.xlane.xlu0 %192
  %v194 = vsel %vm29, %v184, 0.0
  %195 = vadd.xlane.f32.xlu0 %v194
  %v196 = vpop.xlane.xlu0 %195
  %v197 = vsel %vm29, %v185, 0.0
  %198 = vadd.xlane.f32.xlu0 %v197
  %v199 = vpop.xlane.xlu0 %198
  %v200 = vsel %vm29, %v186, 0.0
  %201 = vadd.xlane.f32.xlu0 %v200
  %v202 = vpop.xlane.xlu0 %201
  %v203 = vsel %vm29, %v187, 0.0
  %204 = vadd.xlane.f32.xlu0 %v203
  %v205 = vpop.xlane.xlu0 %204
  %v206 = vsel %vm29, %v188, 0.0
  %207 = vadd.xlane.f32.xlu0 %v206
  %v208 = vpop.xlane.xlu0 %207
  %v209 = vsel %vm29, %v189, 0.0
  %210 = vadd.xlane.f32.xlu0 %v209
  %v211 = vpop.xlane.xlu0 %210
  %v212 = vsel %vm29, %v190, 0.0
  %213 = vadd.xlane.f32.xlu0 %v212
  %v214 = vpop.xlane.xlu0 %213
  %v215 = vmax.f32 %v193, %v205
  %v216 = vmax.f32 %v196, %v208
  %v217 = vmax.f32 %v199, %v211
  %v218 = vmax.f32 %v202, %v214
  %v219 = vmax.f32 %v215, %v216
  %v220 = vmax.f32 %v217, %v218
  %v221 = vmax.f32 %v219, %v220
  %v222 = vsub.f32 %v193, %v221
  %v223 = vsub.f32 %v196, %v221
  %v224 = vsub.f32 %v199, %v221
  %v225 = vsub.f32 %v202, %v221
  %v226 = vsub.f32 %v205, %v221
  %v227 = vsub.f32 %v208, %v221
  %v228 = vsub.f32 %v211, %v221
  %v229 = vsub.f32 %v214, %v221
  %v230 = vmul.f32 %v222, 1.442695
  %v231 = vpow.pop %v230
  %v232 = vmul.f32 %v223, 1.442695
  %v233 = vpow.pop %v232
  %v234 = vmul.f32 %v224, 1.442695
  %v235 = vpow.pop %v234
  %v236 = vmul.f32 %v225, 1.442695
  %v237 = vpow.pop %v236
  %v238 = vmul.f32 %v226, 1.442695
  %v239 = vpow.pop %v238
  %v240 = vmul.f32 %v227, 1.442695
  %v241 = vpow.pop %v240
  %v242 = vmul.f32 %v228, 1.442695
  %v243 = vpow.pop %v242
  %v244 = vmul.f32 %v229, 1.442695
  %v245 = vpow.pop %v244
  %v246 = vadd.f32 %v231, %v233
  %v247 = vadd.f32 %v246, %v235
  %v248 = vadd.f32 %v247, %v237
  %v249 = vadd.f32 %v248, %v239
  %v250 = vadd.f32 %v249, %v241
  %v251 = vadd.f32 %v250, %v243
  %v252 = vadd.f32 %v251, %v245
  %v253 = vrcp.pop %v252
  %v254 = vmul.f32 %v231, %v253
  %v255 = vmul.f32 %v233, %v253
  %v256 = vmul.f32 %v235, %v253
  %v257 = vmul.f32 %v237, %v253
  %v258 = vmul.f32 %v239, %v253
  %v259 = vmul.f32 %v241, %v253
  %v260 = vmul.f32 %v243, %v253
  %v261 = vmul.f32 %v245, %v253
  %v262 = vmul.f32 %v254, %v17
  %v263 = vmul.f32 %v255, %v18
  %v264 = vmul.f32 %v256, %v19
  %v265 = vmul.f32 %v257, %v20
  %v266 = vmul.f32 %v258, %v21
  %v267 = vmul.f32 %v259, %v22
  %v268 = vmul.f32 %v260, %v23
  %v269 = vmul.f32 %v261, %v24
  %v270 = vsel %vm29, %v262, 0.0
  %v271 = vsel %vm29, %v263, 0.0
  %v272 = vadd.f32 %v270, %v271
  %v273 = vsel %vm29, %v264, 0.0
  %v274 = vadd.f32 %v272, %v273
  %v275 = vsel %vm29, %v265, 0.0
  %v276 = vadd.f32 %v274, %v275
  %v277 = vsel %vm29, %v266, 0.0
  %v278 = vadd.f32 %v276, %v277
  %v279 = vsel %vm29, %v267, 0.0
  %v280 = vadd.f32 %v278, %v279
  %v281 = vsel %vm29, %v268, 0.0
  %v282 = vadd.f32 %v280, %v281
  %v283 = vsel %vm29, %v269, 0.0
  %v284 = vadd.f32 %v282, %v283
  %285 = vst.msk [vmem:[%s4] sm:$0xff] %vm29, %v284
  // Predicated region
  $region18: #{attn_forward.1} parent=0 // pred_check
    _
  $region19: #{attn_forward.1} parent=0 // pred_check_branch
    %287 = sbr.rel (0) target = $region21
  $region20: #{attn_forward.1} parent=0 // pred_region
    _
  $region21: #{attn_forward.1} parent=0 // pred_fallthru
    _
  // Predicated region
  $region22: #{attn_forward.1} parent=0 // pred_check
    _
  $region23: #{attn_forward.1} parent=0 // pred_check_branch
    %289 = sbr.rel (0) target = $region25
  $region24: #{attn_forward.1} parent=0 // pred_region
    _
  $region25: #{attn_forward.1} parent=0 // pred_fallthru
    _

</llo_original>
